<compile_context>
chip_gen: v5e
topology: v5e:2x2
jax: 0.10.0
libtpu: 0.0.40
codegen_flags: <defaults>
</compile_context>

<pallas_src>
import jax
import jax.numpy as jnp
from jax.experimental import pallas as pl
from jax.experimental.pallas import tpu as pltpu


def _linear_kernel(x_ref, w_ref, b_ref, o_ref):
    # x_ref: (TR, Kg); w_ref: (Kg, Eg); b_ref: (1, Eg); o_ref: (TR, Eg)
    acc = jnp.dot(x_ref[...], w_ref[...], preferred_element_type=jnp.float32)
    acc = acc + b_ref[...].astype(jnp.float32)
    o_ref[...] = acc.astype(o_ref.dtype)


def _round_up(x, m):
    return ((x + m - 1) // m) * m


def _vmem_scoped_cap_bytes():
    # Generation-aware scoped-VMEM cap: ~half the physical per-core VMEM,
    # never above 64 MiB (v5e/v6e: 128 MiB physical; v7x: only 64 MiB/core).
    try:
        cap = int(pltpu.get_tpu_info().vmem_capacity_bytes)
    except Exception:
        cap = 64 * 1024 * 1024  # conservative fallback (v7x per-core size)
    return max(16 * 1024 * 1024, min(cap // 2, 64 * 1024 * 1024))


def _pick_row_tile(n_rows, k_pad, e_pad, budget_bytes,
                   target_out_bytes=6 * 1024 * 1024):
    """Row tile from a bytes-per-step target, with lane-padded VMEM model.

    k_pad / e_pad are the lane-padded (multiple-of-128) widths of the input
    and output tiles; VMEM really stores those widths, not K and E.
    """
    # ~6 MiB of lane-padded output per grid step amortises per-step overhead.
    rt_target = max(8, target_out_bytes // (e_pad * 4))
    # Double-buffered footprint: 2x input + 2x output blocks (f32-conservative).
    rt_vmem = max(8, budget_bytes // (2 * (k_pad + e_pad) * 4))
    rt = min(rt_target, rt_vmem)
    rt = max(8, (rt // 8) * 8)                       # sublane multiple of 8
    # Keep >= 2 grid steps when possible so the "parallel" row axis can shard
    # across both TensorCores on v7x (harmless on single-TC v5e/v6e).
    if n_rows >= 16:
        rt = min(rt, _round_up(pl.cdiv(n_rows, 2), 8))
    rt = min(rt, _round_up(n_rows, 8))               # never bigger than problem
    return int(max(8, rt))


def laplacian_pe(lap_mx, weight, bias, *, row_tile=None):
    """Pallas equivalent of LaplacianPE.forward.

    lap_mx: [..., lape_dim]
    weight: [embed_dim, lape_dim]   (PyTorch nn.Linear layout)
    bias:   [embed_dim]
    returns: [1, 1, ..., embed_dim]
    """
    *lead, K = lap_mx.shape
    E = weight.shape[0]
    assert weight.shape == (E, K)
    assert bias.shape == (E,)

    x2d = lap_mx.reshape(-1, K)
    R = x2d.shape[0]

    # ---- lane-dense output packing -------------------------------------
    # Fold G = 128 // E rows into one kernel row via a block-diagonal weight
    # so output stores hit all 128 lanes.  Falls back to the direct (masked
    # store) path when the divisibility conditions do not hold.
    G = 1
    if 0 < E < 128 and 128 % E == 0:
        g = 128 // E
        if R >= g and R % g == 0:
            G = g

    if G > 1:
        Rg, Kg, Eg = R // G, G * K, G * E
        x_in = x2d.reshape(Rg, Kg)                         # free metadata reshape
        w_t = jnp.transpose(weight)                        # (K, E)
        # block-diagonal (Kg, Eg): block h on the diagonal equals W.T
        w_in = (jnp.einsum("gh,ke->gkhe", jnp.eye(G, dtype=w_t.dtype), w_t)
                .reshape(Kg, Eg))
        b_in = jnp.tile(bias, G).reshape(1, Eg)
    else:
        Rg, Kg, Eg = R, K, E
        x_in = x2d
        w_in = jnp.transpose(weight)
        b_in = bias.reshape(1, E)

    # Lane-padded widths actually occupied in VMEM.
    k_pad = _round_up(Kg, 128)
    e_pad = _round_up(Eg, 128)

    scoped_cap = _vmem_scoped_cap_bytes()
    budget = int(scoped_cap * 3 // 4)                      # headroom for scratch

    if row_tile is None:
        row_tile = _pick_row_tile(Rg, k_pad, e_pad, budget)

    grid = (pl.cdiv(Rg, row_tile),)

    # Padded-footprint estimate: 2x input, 2x output, 2x weight, 2x bias tiles.
    block_bytes = (2 * row_tile * (k_pad + e_pad)
                   + 2 * _round_up(Kg, 8) * e_pad
                   + 2 * 8 * e_pad) * 4
    vmem_limit = int(min(scoped_cap,
                         max(8 * 1024 * 1024, block_bytes + 2 * 1024 * 1024)))

    out2d = pl.pallas_call(
        _linear_kernel,
        out_shape=jax.ShapeDtypeStruct((Rg, Eg), lap_mx.dtype),
        grid_spec=pltpu.PrefetchScalarGridSpec(
            num_scalar_prefetch=0,
            grid=grid,
            in_specs=[
                pl.BlockSpec((row_tile, Kg), lambda i: (i, 0)),
                pl.BlockSpec((Kg, Eg), lambda i: (0, 0)),
                pl.BlockSpec((1, Eg), lambda i: (0, 0)),
            ],
            out_specs=pl.BlockSpec((row_tile, Eg), lambda i: (i, 0)),
        ),
        compiler_params=pltpu.CompilerParams(
            dimension_semantics=("parallel",),
            vmem_limit_bytes=vmem_limit,
        ),
    )(x_in, w_in, b_in)

    # (Rg, Eg) and (R, E) share the same row-major HBM layout -> free reshape.
    out = out2d.reshape(*lead, E)
    return out[None, None]                                 # .unsqueeze(0).unsqueeze(0)


def _reference(lap_mx, weight, bias):
    y = (lap_mx.astype(jnp.float32) @ weight.astype(jnp.float32).T
         + bias.astype(jnp.float32))
    return y.astype(lap_mx.dtype)[None, None]


if __name__ == "__main__":
    key = jax.random.PRNGKey(0)
    k_x, k_w, k_b = jax.random.split(key, 3)

    num_nodes, lape_dim, embed_dim = 16, 8, 32

    lap_mx = jax.random.normal(k_x, (num_nodes, lape_dim), dtype=jnp.float32)
    # nn.Linear(lape_dim, embed_dim): weight [embed_dim, lape_dim], bias [embed_dim]
    weight = jax.random.normal(k_w, (embed_dim, lape_dim), dtype=jnp.float32) * 0.1
    bias = jax.random.normal(k_b, (embed_dim,), dtype=jnp.float32) * 0.1

    out = laplacian_pe(lap_mx, weight, bias)
    out = jax.block_until_ready(out)

    ref = _reference(lap_mx, weight, bias)
    assert out.shape == (1, 1, num_nodes, embed_dim), out.shape
    assert out.dtype == lap_mx.dtype
    assert jnp.allclose(out, ref, atol=1e-5, rtol=1e-5)

    print("KERNEL_OK")
</pallas_src>

<mosaic_0001>
module attributes {stable_mosaic.version = 11 : i64} {
  func.func @_linear_kernel(%arg0: i32, %arg1: memref<8x32xf32, #tpu.memory_space<vmem>>, %arg2: memref<32x128xf32, #tpu.memory_space<vmem>>, %arg3: memref<1x128xf32, #tpu.memory_space<vmem>>, %arg4: memref<8x128xf32, #tpu.memory_space<vmem>>) attributes {dimension_semantics = [#tpu.dimension_semantics<parallel>], iteration_bounds = array<i64: 1>, scalar_prefetch = 0 : i64, scratch_operands = 0 : i64, tpu.core_type = #tpu.core_type<tc>, window_params = [{transform_indices = @transform_0, window_bounds = array<i64: 8, 32>}, {pipeline_mode = #tpu.pipeline_mode<synchronous>, transform_indices = @transform_1, window_bounds = array<i64: 32, 128>}, {pipeline_mode = #tpu.pipeline_mode<synchronous>, transform_indices = @transform_2, window_bounds = array<i64: 1, 128>}, {transform_indices = @transform_3, window_bounds = array<i64: 8, 128>}]} {
    %c0 = arith.constant 0 : index
    %c0_0 = arith.constant 0 : index
    %0 = vector.load %arg1[%c0, %c0_0] : memref<8x32xf32, #tpu.memory_space<vmem>>, vector<8x32xf32>
    %c0_1 = arith.constant 0 : index
    %c0_2 = arith.constant 0 : index
    %1 = vector.load %arg2[%c0_1, %c0_2] : memref<32x128xf32, #tpu.memory_space<vmem>>, vector<32x128xf32>
    %cst = arith.constant dense<0.000000e+00> : vector<8x128xf32>
    %2 = tpu.matmul %0, %1, %cst {dimension_numbers = #tpu.dot_dimension_numbers<[1], [0], [0], [1], [0, 0, 1, 1], [], []>} : vector<8x32xf32>, vector<32x128xf32>, vector<8x128xf32> -> vector<8x128xf32>
    %c0_3 = arith.constant 0 : index
    %c0_4 = arith.constant 0 : index
    %3 = vector.load %arg3[%c0_3, %c0_4] : memref<1x128xf32, #tpu.memory_space<vmem>>, vector<1x128xf32>
    %4 = vector.broadcast %3 : vector<1x128xf32> to vector<8x128xf32>
    %5 = arith.addf %2, %4 : vector<8x128xf32>
    %c0_5 = arith.constant 0 : index
    %c0_6 = arith.constant 0 : index
    %6 = vector.load %arg4[%c0_5, %c0_6] : memref<8x128xf32, #tpu.memory_space<vmem>>, vector<8x128xf32>
    tpu.vector_store %arg4[%c0_5, %c0_6], %5 {strides = array<i32>} : memref<8x128xf32, #tpu.memory_space<vmem>>, vector<8x128xf32>,
    return
  }
  func.func @transform_0(%arg0: i32) -> (i32, i32) {
    %c0_i32 = arith.constant 0 : i32
    %c0_i32_0 = arith.constant 0 : i32
    return %arg0, %c0_i32 : i32, i32
  }
  func.func @transform_1(%arg0: i32) -> (i32, i32) {
    %c0_i32 = arith.constant 0 : i32
    %c0_i32_0 = arith.constant 0 : i32
    %c0_i32_1 = arith.constant 0 : i32
    return %c0_i32, %c0_i32_0 : i32, i32
  }
  func.func @transform_2(%arg0: i32) -> (i32, i32) {
    %c0_i32 = arith.constant 0 : i32
    %c0_i32_0 = arith.constant 0 : i32
    %c0_i32_1 = arith.constant 0 : i32
    return %c0_i32, %c0_i32_0 : i32, i32
  }
  func.func @transform_3(%arg0: i32) -> (i32, i32) {
    %c0_i32 = arith.constant 0 : i32
    %c0_i32_0 = arith.constant 0 : i32
    return %arg0, %c0_i32 : i32, i32
  }
}

</mosaic_0001>

<llo_original>
// kernel: tpu_custom_call.1
$region0: #{tpu_custom_call.1}
  #allocation0 [shape = 'u32[]', space=smem, size = 0x4, offset = 0x4, fixed_abs, tag = 'smem constant byte address 0x4 - core index']
  #allocation1 [shape = 'u32[72,128]{1,0:T(1,128)}', space=vmem, size = 0x9000, scoped, tag = 'internal scratch']
  %s0 = inlined_call_operand.hbm [shape: f32[4,32], index: 0, kind: input, shape index: {}]
  %s1 = inlined_call_operand.hbm [shape: f32[32,128], index: 1, kind: input, shape index: {}]
  %s2 = inlined_call_operand.vmem [shape: f32[1,128], index: 2, kind: input, shape index: {}]
  %s3 = inlined_call_operand.hbm [shape: f32[4,128], index: 3, kind: output, shape index: {}]
  %s4 = sld [smem:[#allocation0]]
  $region30: #{tpu_custom_call.1} parent=0
    _
  %s6 = ssub.s32 1, %s4
  %s7 = scalar_select 0, %s6, %s4
  $region1: #{tpu_custom_call.1} parent=0
    #allocation2 [shape = 'u8[4096]{0}', space=vmem, size = 0x1000, scoped, tag = 'input window, operand 0, single buffered']
    #allocation3 [shape = 's32[1]{0}', space=sflag, size = 0x4, scoped, tag = 'scoped memory for tpu_custom_call.1']
    #allocation4 [shape = 's32[1]{0}', space=sflag, size = 0x4, scoped, tag = 'scoped memory for tpu_custom_call.1']
    #allocation5 [shape = 'u8[16384]{0}', space=vmem, size = 0x4000, scoped, tag = 'input window, operand 1, single buffered']
    #allocation6 [shape = 's32[1]{0}', space=sflag, size = 0x4, scoped, tag = 'scoped memory for tpu_custom_call.1']
    #allocation7 [shape = 'u8[4096]{0}', space=vmem, size = 0x1000, scoped, tag = 'output window, operand 0, single buffered']
    %8 = vsyncpa [#allocation3], 0
    %9 = vsyncpa [#allocation6], 0
    %10 = vsyncpa [#allocation4], 0
    // Predicated region
    $region2: #{tpu_custom_call.1} parent=1 // pred_check
      _
    $region3: #{tpu_custom_call.1} parent=1 // pred_check_branch
      %12 = sbr.rel (0) target = $region5
    $region4: #{tpu_custom_call.1} parent=1 // pred_region
      %14 = vsyncadd [#allocation3], 64
      %s15 = sshll.u32 %s0, 4
      %s16 = int_to_ptr.hbm [resolvable:$true] %s15
      %s17 = sshll.u32 [#allocation2], 4
      %s18 = int_to_ptr.vmem [resolvable:$true] %s17
      %23 = dma.hbm_to_vmem [thread:$0]  %s16, 64, %s18, [#allocation3], 64, 64, 4
    $region5: #{tpu_custom_call.1} parent=1 // pred_fallthru
      _
    // Predicated region
    $region6: #{tpu_custom_call.1} parent=1 // pred_check
      _
    $region7: #{tpu_custom_call.1} parent=1 // pred_check_branch
      %25 = sbr.rel (0) target = $region9
    $region8: #{tpu_custom_call.1} parent=1 // pred_region
      %27 = vsyncadd [#allocation6], 0
      %s28 = sshll.u32 %s1, 4
      %s29 = int_to_ptr.hbm [resolvable:$true] %s28
      %s30 = sshll.u32 [#allocation5], 4
      %s31 = int_to_ptr.vmem [resolvable:$true] %s30
      %36 = dma.hbm_to_vmem [thread:$0]  %s29, 512, %s31, [#allocation6], 128, 128, 8
    $region9: #{tpu_custom_call.1} parent=1 // pred_fallthru
      _
    // Predicated region
    $region10: #{tpu_custom_call.1} parent=1 // pred_check
      _
    $region11: #{tpu_custom_call.1} parent=1 // pred_check_branch
      %38 = sbr.rel (0) target = $region13
    $region12: #{tpu_custom_call.1} parent=1 // pred_region
      _
    $region13: #{tpu_custom_call.1} parent=1 // pred_fallthru
      _
    // Predicated region
    $region14: #{tpu_custom_call.1} parent=1 // pred_check
      _
    $region15: #{tpu_custom_call.1} parent=1 // pred_check_branch
      %40 = sbr.rel (0) target = $region17
    $region16: #{tpu_custom_call.1} parent=1 // pred_region
      %42 = dma.done [#allocation3], 128
    $region17: #{tpu_custom_call.1} parent=1 // pred_fallthru
      _
    // Predicated region
    $region18: #{tpu_custom_call.1} parent=1 // pred_check
      _
    $region19: #{tpu_custom_call.1} parent=1 // pred_check_branch
      %44 = sbr.rel (0) target = $region21
    $region20: #{tpu_custom_call.1} parent=1 // pred_region
      %46 = dma.done [#allocation6], 512
    $region21: #{tpu_custom_call.1} parent=1 // pred_fallthru
      _
    %v47 = vld [vmem:[#allocation2] sm:$0xff]
    %v48 = vld [vmem:[#allocation5] sm:$0xff]
    %v49 = vld [vmem:[#allocation5 + $0x8] sm:$0xff]
    %v50 = vld [vmem:[#allocation5 + $0x10] sm:$0xff]
    %v51 = vld [vmem:[#allocation5 + $0x18] sm:$0xff]
    %v52 = vld [vmem:[%s2] sm:$0x1]
    %v54 = vperm.slane %v52, 0
    %vm56 = vcmask 261120
    %v58 = vsel %vm56, %v47, 0
    %60 = vmatpush.msra.mxu0 0.0
    %61 = vmatpush.msra.mxu0 0.0
    %62 = vmatpush.msra.mxu0 0.0
    %63 = vmatpush.msra.mxu0 0.0
    %64 = vmatpush.msra.mxu0 0.0
    %65 = vmatpush.msra.mxu0 0.0
    %66 = vmatpush.msra.mxu0 0.0
    %67 = vmatpush.msra.mxu0 0.0
    %68 = vmatpush.msra.mxu0 0.0
    %69 = vmatpush.msra.mxu0 0.0
    %70 = vmatpush.msra.mxu0 0.0
    %71 = vmatpush.msra.mxu0 0.0
    %72 = vmatpush.msra.mxu0 %v51
    %73 = vmatpush.msra.mxu0 %v50
    %74 = vmatpush.msra.mxu0 %v49
    %75 = vmatpush.msra.mxu0 %v48
    %76 = vmatmul.f32.gmra.mxu0 %v58
    %v77 = vpop.f32.mrf.mxu0
    %v78 = vadd.f32 %v54, %v77
    %79 = vdwg.mxu0
    %80 = vst [vmem:[#allocation7] sm:$0xff] %v78
    // Predicated region
    $region22: #{tpu_custom_call.1} parent=1 // pred_check
      _
    $region23: #{tpu_custom_call.1} parent=1 // pred_check_branch
      %82 = sbr.rel (0) target = $region25
    $region24: #{tpu_custom_call.1} parent=1 // pred_region
      %84 = vsyncadd [#allocation4], 64
      %s85 = sshll.u32 [#allocation7], 4
      %s86 = int_to_ptr.vmem [resolvable:$true] %s85
      %s87 = sshll.u32 %s3, 4
      %s88 = int_to_ptr.hbm [resolvable:$true] %s87
      %93 = dma.vmem_to_hbm [thread:$0]  %s86, 64, %s88, [#allocation4], 64, 64, 4
    $region25: #{tpu_custom_call.1} parent=1 // pred_fallthru
      _
    // Predicated region
    $region26: #{tpu_custom_call.1} parent=1 // pred_check
      _
    $region27: #{tpu_custom_call.1} parent=1 // pred_check_branch
      %95 = sbr.rel (0) target = $region29
    $region28: #{tpu_custom_call.1} parent=1 // pred_region
      %97 = dma.done [#allocation4], 128
    $region29: #{tpu_custom_call.1} parent=1 // pred_fallthru
      _
    %98 = vsyncpa [#allocation3], 1
    %99 = vsyncpa [#allocation6], 1
    %100 = vsyncpa [#allocation4], 1

</llo_original>
